<compile_context>
chip_gen: v5e
topology: v5e:2x2
jax: 0.10.0
libtpu: 0.0.40
codegen_flags: <defaults>
</compile_context>

<pallas_src>
import jax
import jax.numpy as jnp
from jax.experimental import pallas as pl
from jax.experimental.pallas import tpu as pltpu


# ----------------------------------------------------------------------------
# View: identity copy kernel (the reshape itself is metadata).
# ----------------------------------------------------------------------------
def _copy_kernel(x_ref, o_ref):
    o_ref[...] = x_ref[...]


def _resolve_view_shape(total, shape):
    shape = list(shape)
    if shape.count(-1) > 1:
        raise ValueError("only one -1 allowed in view shape")
    if -1 in shape:
        known = 1
        for d in shape:
            if d != -1:
                known *= d
        shape[shape.index(-1)] = total // known
    return tuple(shape)


def view_forward(x, shape, contiguous=False):
    """Pallas equivalent of View.forward(x) == x.view(*shape).
    torch.view is metadata-only, so the target reshape lives in the wrapper; the
    data is routed through a lane-dense identity copy so the op has a real TPU
    kernel.  `contiguous` is a no-op in JAX."""
    del contiguous
    total = x.size
    target = _resolve_view_shape(total, shape)
    # Lane-dense 2D staging layout: 128-wide lanes when possible.
    cols = 128 if total % 128 == 0 else total
    rows = total // cols
    x2 = x.reshape(rows, cols)
    y2 = pl.pallas_call(
        _copy_kernel,
        out_shape=jax.ShapeDtypeStruct((rows, cols), x.dtype),
        grid_spec=pltpu.PrefetchScalarGridSpec(
            num_scalar_prefetch=0,
            grid=(1,),
            in_specs=[pl.BlockSpec((rows, cols), lambda i: (0, 0))],
            out_specs=pl.BlockSpec((rows, cols), lambda i: (0, 0)),
        ),
    )(x2)
    return y2.reshape(target)


# ----------------------------------------------------------------------------
# AdditiveAttention (Bahdanau) forward.
# ----------------------------------------------------------------------------
def _additive_attention_kernel(q_ref, k_ref, v_ref, wqk_ref, b_ref, ws_ref,
                               ctx_ref, attn_ref):
    TB, S, H = q_ref.shape          # one grid step == TB batch elements
    R = TB * S

    # ---- fused query/key projection on the MXU: (R, 2H) @ (2H, H), bf16 in, f32 out
    q2 = q_ref[...].reshape(R, H)
    k2 = k_ref[...].reshape(R, H)
    qk = jnp.concatenate([q2, k2], axis=-1).astype(wqk_ref.dtype)         # (R, 2H)
    proj = jnp.dot(qk, wqk_ref[...], preferred_element_type=jnp.float32)  # (R, H)

    # ---- tanh(key_proj + query_proj + bias): EUP, f32 (v5e-safe elementwise path)
    t = jnp.tanh(proj + b_ref[...])                                       # (R, H)

    # ---- score: VPU multiply + lane reduction (keeps the MXU free, no N=1 matmul)
    score_col = jnp.sum(t * ws_ref[...], axis=-1, keepdims=True)          # (R, 1)
    score = score_col.reshape(TB, S)     # lane-dense rows: S on the lane axis
    # score_proj bias omitted on purpose: a constant shift cancels in the softmax.

    # ---- numerically stable softmax over the sequence (lane) axis
    m = jnp.max(score, axis=-1, keepdims=True)                            # (TB, 1)
    e = jnp.exp(score - m)                                                # (TB, S)
    den = jnp.sum(e, axis=-1, keepdims=True)                              # (TB, 1)
    inv = pl.reciprocal(den, approx=True)        # EUP slot (otherwise idle)
    inv = inv * (2.0 - den * inv)                # one Newton step -> full f32 accuracy
    attn = e * inv                                                        # (TB, S)
    attn_ref[...] = attn.astype(attn_ref.dtype)

    # ---- context[t, :] = sum_s attn[t, s] * value[t, s, :]   (VPU + sublane reduce)
    w_col = attn.reshape(R, 1)
    prod = w_col * v_ref[...].reshape(R, H)                               # (R, H)
    ctx = jnp.sum(prod.reshape(TB, S, H), axis=1)                         # (TB, H)
    ctx_ref[...] = ctx.astype(ctx_ref.dtype)


def _pick_batch_block(B, S, target_rows=256):
    """Batch elements per grid step: big enough that TB*S rows amortize the
    ~0.35us per-step pipeline overhead, but keep >= 2 parallel grid steps when
    B >= 2 so the v7x megacore (2 TensorCores) can shard the grid."""
    tb = max(1, min(B, target_rows // max(S, 1)))
    if B >= 2:
        tb = min(tb, max(1, B // 2))
    while B % tb:                    # keep blocks exact (no ragged edge block)
        tb -= 1
    return tb


def additive_attention(query, key, value, wq, wk, bias, ws, bs,
                       *, block_b=None, mxu_dtype=jnp.bfloat16):
    """query/key/value: (B, S, H).  wq/wk: (H, H) in torch Linear (out, in) convention.
    bias: (H,), ws: (1, H), bs: (1,) (unused in-kernel: softmax-invariant constant).
    Returns (context (B, 1, H), attn (B, S))."""
    B, S, H = query.shape
    # Fused, pre-transposed projection weight [Wq^T ; Wk^T] -> (2H, H), MXU dtype.
    wqk = jnp.concatenate([wq.T, wk.T], axis=0).astype(mxu_dtype)
    bias_row = bias.reshape(1, H).astype(jnp.float32)
    ws_row = ws.reshape(1, H).astype(jnp.float32)
    del bs  # constant score offset — cancels in the softmax (see review note)

    tb = _pick_batch_block(B, S) if block_b is None else block_b
    grid = (B // tb,)

    # Explicit scoped-VMEM budget: double-buffered q/k/v blocks + weights + headroom.
    block_bytes = 3 * tb * S * H * query.dtype.itemsize
    vmem_limit = int(min(max(4 * block_bytes + (8 << 20), 16 << 20), 64 << 20))

    ctx2d, attn = pl.pallas_call(
        _additive_attention_kernel,
        out_shape=(jax.ShapeDtypeStruct((B, H), query.dtype),
                   jax.ShapeDtypeStruct((B, S), jnp.float32)),
        grid_spec=pltpu.PrefetchScalarGridSpec(
            num_scalar_prefetch=0,
            grid=grid,
            in_specs=[
                pl.BlockSpec((tb, S, H), lambda b: (b, 0, 0)),   # query block
                pl.BlockSpec((tb, S, H), lambda b: (b, 0, 0)),   # key block
                pl.BlockSpec((tb, S, H), lambda b: (b, 0, 0)),   # value block
                pl.BlockSpec((2 * H, H), lambda b: (0, 0)),      # [Wq^T; Wk^T]
                pl.BlockSpec((1, H), lambda b: (0, 0)),          # bias row
                pl.BlockSpec((1, H), lambda b: (0, 0)),          # score_proj weight row
            ],
            out_specs=[
                pl.BlockSpec((tb, H), lambda b: (b, 0)),         # context rows (lane-dense)
                pl.BlockSpec((tb, S), lambda b: (b, 0)),         # attention rows (lane-dense)
            ],
        ),
        compiler_params=pltpu.CompilerParams(
            dimension_semantics=("parallel",),
            vmem_limit_bytes=vmem_limit),
    )(query, key, value, wqk, bias_row, ws_row)

    return ctx2d[:, None, :], attn        # (B, 1, H) metadata reshape, (B, S)


def additive_attention_ref(query, key, value, wq, wk, bias, ws, bs, mxu_dtype=None):
    """Pure-JAX reference mirroring the PyTorch forward.  If mxu_dtype is given,
    the projection matmul uses the same low-precision operands as the kernel
    (f32 accumulation) for a tight comparison."""
    if mxu_dtype is None:
        proj = query @ wq.T + key @ wk.T
    else:
        qk = jnp.concatenate([query, key], axis=-1).astype(mxu_dtype)
        wqk = jnp.concatenate([wq.T, wk.T], axis=0).astype(mxu_dtype)
        proj = jnp.einsum('bsk,kh->bsh', qk, wqk, preferred_element_type=jnp.float32)
    score = (jnp.tanh(proj + bias) @ ws.T + bs)[..., 0]        # (B, S)
    attn = jax.nn.softmax(score, axis=-1)
    ctx = jnp.einsum('bs,bsh->bh', attn, value)[:, None, :]    # (B, 1, H)
    return ctx, attn


if __name__ == "__main__":
    key0 = jax.random.PRNGKey(0)
    kx, *ks = jax.random.split(key0, 9)

    # ---------------- View: (2, 4, 16, 16) -> (2, -1) ----------------
    x = jax.random.normal(kx, (2, 4, 16, 16), jnp.float32)
    y = view_forward(x, (2, -1))
    jax.block_until_ready(y)
    assert y.shape == (2, 4 * 16 * 16)
    assert jnp.array_equal(y, x.reshape(2, -1))

    # ---------------- AdditiveAttention ----------------
    B, S, H = 2, 8, 32
    query = jax.random.normal(ks[0], (B, S, H), jnp.float32)
    keyx = jax.random.normal(ks[1], (B, S, H), jnp.float32)
    value = jax.random.normal(ks[2], (B, S, H), jnp.float32)
    wq = jax.random.uniform(ks[3], (H, H), jnp.float32, -0.1, 0.1)   # query_proj.weight
    wk = jax.random.uniform(ks[4], (H, H), jnp.float32, -0.1, 0.1)   # key_proj.weight
    bias = jax.random.uniform(ks[5], (H,), jnp.float32, -0.1, 0.1)   # self.bias
    ws = jax.random.uniform(ks[6], (1, H), jnp.float32, -0.1, 0.1)   # score_proj.weight
    bs = jax.random.uniform(ks[7], (1,), jnp.float32, -0.1, 0.1)     # score_proj.bias

    ctx, attn = additive_attention(query, keyx, value, wq, wk, bias, ws, bs)
    jax.block_until_ready((ctx, attn))
    assert ctx.shape == (B, 1, H) and attn.shape == (B, S)

    # Tight check vs a reference that uses the same bf16 MXU operands.
    ctx_r, attn_r = additive_attention_ref(query, keyx, value, wq, wk, bias, ws, bs,
                                           mxu_dtype=jnp.bfloat16)
    assert jnp.allclose(ctx, ctx_r, atol=1e-4, rtol=1e-4)
    assert jnp.allclose(attn, attn_r, atol=1e-4, rtol=1e-4)

    # Loose check vs the pure-f32 reference (only the MXU operands are bf16).
    ctx_f, attn_f = additive_attention_ref(query, keyx, value, wq, wk, bias, ws, bs)
    assert jnp.allclose(ctx, ctx_f, atol=1e-2, rtol=1e-2)
    assert jnp.allclose(attn, attn_f, atol=1e-2, rtol=1e-2)

    print("KERNEL_OK")
</pallas_src>

<mosaic_0001>
module attributes {stable_mosaic.version = 11 : i64} {
  func.func @_copy_kernel(%arg0: i32, %arg1: memref<16x128xf32, #tpu.memory_space<vmem>>, %arg2: memref<16x128xf32, #tpu.memory_space<vmem>>) attributes {dimension_semantics = [#tpu.dimension_semantics<arbitrary>], iteration_bounds = array<i64: 1>, scalar_prefetch = 0 : i64, scratch_operands = 0 : i64, tpu.core_type = #tpu.core_type<tc>, window_params = [{pipeline_mode = #tpu.pipeline_mode<synchronous>, transform_indices = @transform_0, window_bounds = array<i64: 16, 128>}, {pipeline_mode = #tpu.pipeline_mode<synchronous>, transform_indices = @transform_1, window_bounds = array<i64: 16, 128>}]} {
    %c0 = arith.constant 0 : index
    %c0_0 = arith.constant 0 : index
    %0 = vector.load %arg1[%c0, %c0_0] : memref<16x128xf32, #tpu.memory_space<vmem>>, vector<16x128xf32>
    %c0_1 = arith.constant 0 : index
    %c0_2 = arith.constant 0 : index
    %1 = vector.load %arg2[%c0_1, %c0_2] : memref<16x128xf32, #tpu.memory_space<vmem>>, vector<16x128xf32>
    tpu.vector_store %arg2[%c0_1, %c0_2], %0 {strides = array<i32>} : memref<16x128xf32, #tpu.memory_space<vmem>>, vector<16x128xf32>,
    return
  }
  func.func @transform_0(%arg0: i32) -> (i32, i32) {
    %c0_i32 = arith.constant 0 : i32
    %c0_i32_0 = arith.constant 0 : i32
    %c0_i32_1 = arith.constant 0 : i32
    return %c0_i32, %c0_i32_0 : i32, i32
  }
  func.func @transform_1(%arg0: i32) -> (i32, i32) {
    %c0_i32 = arith.constant 0 : i32
    %c0_i32_0 = arith.constant 0 : i32
    %c0_i32_1 = arith.constant 0 : i32
    return %c0_i32, %c0_i32_0 : i32, i32
  }
}

</mosaic_0001>

<llo_original>
// kernel: tpu_custom_call.1
$region0: #{tpu_custom_call.1}
  #allocation0 [shape = 'u32[]', space=smem, size = 0x4, offset = 0x4, fixed_abs, tag = 'smem constant byte address 0x4 - core index']
  #allocation1 [shape = 'u32[72,128]{1,0:T(1,128)}', space=vmem, size = 0x9000, scoped, tag = 'internal scratch']
  %s0 = inlined_call_operand.hbm [shape: f32[16,128], index: 0, kind: input, shape index: {}]
  %s1 = inlined_call_operand.hbm [shape: f32[16,128], index: 1, kind: output, shape index: {}]
  %s2 = sld [smem:[#allocation0]]
  $region18: #{tpu_custom_call.1} parent=0
    _
  %s4 = ssub.s32 1, %s2
  %s5 = scalar_select 0, %s4, %s2
  $region1: #{tpu_custom_call.1} parent=0
    #allocation2 [shape = 'u8[8192]{0}', space=vmem, size = 0x2000, scoped, tag = 'input window, operand 0, single buffered']
    #allocation3 [shape = 's32[1]{0}', space=sflag, size = 0x4, scoped, tag = 'scoped memory for tpu_custom_call.1']
    #allocation4 [shape = 's32[1]{0}', space=sflag, size = 0x4, scoped, tag = 'scoped memory for tpu_custom_call.1']
    #allocation5 [shape = 'u8[8192]{0}', space=vmem, size = 0x2000, scoped, tag = 'output window, operand 0, single buffered']
    %6 = vsyncpa [#allocation3], 0
    %7 = vsyncpa [#allocation4], 0
    // Predicated region
    $region2: #{tpu_custom_call.1} parent=1 // pred_check
      _
    $region3: #{tpu_custom_call.1} parent=1 // pred_check_branch
      %9 = sbr.rel (0) target = $region5
    $region4: #{tpu_custom_call.1} parent=1 // pred_region
      %11 = vsyncadd [#allocation3], 0
      %s12 = sshll.u32 %s0, 4
      %s13 = int_to_ptr.hbm [resolvable:$true] %s12
      %s14 = sshll.u32 [#allocation2], 4
      %s15 = int_to_ptr.vmem [resolvable:$true] %s14
      %20 = dma.hbm_to_vmem [thread:$0]  %s13, 256, %s15, [#allocation3], 128, 128, 8
    $region5: #{tpu_custom_call.1} parent=1 // pred_fallthru
      _
    // Predicated region
    $region6: #{tpu_custom_call.1} parent=1 // pred_check
      _
    $region7: #{tpu_custom_call.1} parent=1 // pred_check_branch
      %22 = sbr.rel (0) target = $region9
    $region8: #{tpu_custom_call.1} parent=1 // pred_region
      %24 = dma.done [#allocation3], 256
    $region9: #{tpu_custom_call.1} parent=1 // pred_fallthru
      _
    %v25 = vld [vmem:[#allocation2] sm:$0xff]
    %v26 = vld [vmem:[#allocation2 + $0x8] sm:$0xff]
    %27 = vst [vmem:[#allocation5] sm:$0xff] %v25
    %28 = vst [vmem:[#allocation5 + $0x8] sm:$0xff] %v26
    // Predicated region
    $region10: #{tpu_custom_call.1} parent=1 // pred_check
      _
    $region11: #{tpu_custom_call.1} parent=1 // pred_check_branch
      %30 = sbr.rel (0) target = $region13
    $region12: #{tpu_custom_call.1} parent=1 // pred_region
      %32 = vsyncadd [#allocation4], 0
      %s33 = sshll.u32 [#allocation5], 4
      %s34 = int_to_ptr.vmem [resolvable:$true] %s33
      %s35 = sshll.u32 %s1, 4
      %s36 = int_to_ptr.hbm [resolvable:$true] %s35
      %41 = dma.vmem_to_hbm [thread:$0]  %s34, 256, %s36, [#allocation4], 128, 128, 8
    $region13: #{tpu_custom_call.1} parent=1 // pred_fallthru
      _
    // Predicated region
    $region14: #{tpu_custom_call.1} parent=1 // pred_check
      _
    $region15: #{tpu_custom_call.1} parent=1 // pred_check_branch
      %43 = sbr.rel (0) target = $region17
    $region16: #{tpu_custom_call.1} parent=1 // pred_region
      %45 = dma.done [#allocation4], 256
    $region17: #{tpu_custom_call.1} parent=1 // pred_fallthru
      _
    %46 = vsyncpa [#allocation3], 1
    %47 = vsyncpa [#allocation4], 1

</llo_original>
